<compile_context>
chip_gen: v5e
topology: v5e:2x2
jax: 0.10.0
libtpu: 0.0.40
codegen_flags: <defaults>
</compile_context>

<pallas_src>
import jax
import jax.numpy as jnp
from jax.experimental import pallas as pl
from jax.experimental.pallas import tpu as pltpu

_LANE = 128
_MAX_TB = 2048  # lanes per tile at large batch


def mlp_kernel(params_ref, x_ref, o_ref):
    # params_ref: (11,) f32 in SMEM, packed as
    #   [w1[0,0], w1[1,0], w1[2,0],   # hidden unit 0 weights
    #    w1[0,1], w1[1,1], w1[2,1],   # hidden unit 1 weights
    #    b1[0], b1[1], w2[0], w2[1], b2[0]]
    # x_ref: (3, TB) f32 tile in VMEM (features on sublanes, batch on lanes).
    # o_ref: (1, TB) f32 tile in VMEM.
    x0 = x_ref[0:1, :]  # (1, TB)
    x1 = x_ref[1:2, :]
    x2 = x_ref[2:3, :]

    # hidden = ReLU(x @ W1 + b1), one lane-dense row per hidden unit (VPU only).
    h0 = x0 * params_ref[0] + x1 * params_ref[1] + x2 * params_ref[2] + params_ref[6]
    h1 = x0 * params_ref[3] + x1 * params_ref[4] + x2 * params_ref[5] + params_ref[7]
    a0 = jnp.maximum(h0, 0.0)
    a1 = jnp.maximum(h1, 0.0)

    # out = a @ W2 + b2  (2-wide matvec -> broadcast multiply + add).
    o_ref[...] = a0 * params_ref[8] + a1 * params_ref[9] + params_ref[10]


def mlp_forward(x, w1, b1, w2, b2):
    """x: (B, 3) f32; w1: (3, 2); b1: (2,); w2: (2,); b2: (1,). Returns (B, 1)."""
    B = x.shape[0]

    # Flatten params into one (11,) f32 SMEM array (w1 column-major first).
    params = jnp.concatenate(
        [w1.T.reshape(-1), b1.reshape(-1), w2.reshape(-1), b2.reshape(-1)]
    ).astype(jnp.float32)

    # Lane-dense layout: batch on lanes. Pad batch up to a multiple of TB.
    if B <= _MAX_TB:
        tb = ((B + _LANE - 1) // _LANE) * _LANE
        padded_b = tb
    else:
        tb = _MAX_TB
        padded_b = ((B + tb - 1) // tb) * tb

    xt = x.astype(jnp.float32).T  # (3, B)
    if padded_b != B:
        xt = jnp.pad(xt, ((0, 0), (0, padded_b - B)))

    num_tiles = padded_b // tb

    # ~16 useful flops per row (2 FMAs*3 + 2 bias + 1 ReLU-ish + FMA*2 + bias).
    flops = B * (2 * 3 * 2 + 2 + 2 + 2 * 2 * 1 + 1)
    bytes_accessed = 4 * (3 * padded_b + 1 * padded_b + params.size)

    out_t = pl.pallas_call(
        mlp_kernel,
        out_shape=jax.ShapeDtypeStruct((1, padded_b), jnp.float32),
        grid_spec=pltpu.PrefetchScalarGridSpec(
            num_scalar_prefetch=0,
            grid=(num_tiles,),
            in_specs=[
                pl.BlockSpec(memory_space=pltpu.MemorySpace.SMEM),      # params (11,)
                pl.BlockSpec((3, tb), lambda i: (0, i)),                # x tile
            ],
            out_specs=pl.BlockSpec((1, tb), lambda i: (0, i)),          # out tile
        ),
        compiler_params=pltpu.CompilerParams(
            dimension_semantics=("parallel",),
        ),
        cost_estimate=pl.CostEstimate(
            flops=flops, transcendentals=0, bytes_accessed=bytes_accessed),
    )(params, xt)

    # Strip batch padding and return in the original (B, 1) layout.
    return out_t[:, :B].T


def init_params(key):
    """Deterministic init mimicking PyTorch nn.Linear default U(-1/sqrt(fan_in), +1/sqrt(fan_in))."""
    k1, k2, k3, k4 = jax.random.split(key, 4)
    bound1 = 1.0 / jnp.sqrt(3.0)   # fan_in = 3
    bound2 = 1.0 / jnp.sqrt(2.0)   # fan_in = 2
    w1 = jax.random.uniform(k1, (3, 2), jnp.float32, -bound1, bound1)   # (in, out)
    b1 = jax.random.uniform(k2, (2,), jnp.float32, -bound1, bound1)
    w2 = jax.random.uniform(k3, (2,), jnp.float32, -bound2, bound2)     # (in,) for out=1
    b2 = jax.random.uniform(k4, (1,), jnp.float32, -bound2, bound2)
    return w1, b1, w2, b2


if __name__ == "__main__":
    key = jax.random.PRNGKey(0)
    w1, b1, w2, b2 = init_params(key)

    # Small batch of 4 inputs with 3 features each (the PyTorch script uses x = ones(3)).
    x = jnp.ones((4, 3), jnp.float32)

    out = jax.jit(mlp_forward)(x, w1, b1, w2, b2)
    out = jax.block_until_ready(out)

    # Pure-JAX reference of the same forward pass.
    ref = jnp.maximum(x @ w1 + b1, 0.0) @ w2[:, None] + b2
    assert out.shape == (4, 1)
    assert jnp.allclose(out, ref, atol=1e-5, rtol=1e-5)

    print("KERNEL_OK")
</pallas_src>

<mosaic_0001>
module attributes {stable_mosaic.version = 11 : i64} {
  func.func @mlp_kernel(%arg0: i32, %arg1: memref<11xf32, #tpu.memory_space<smem>>, %arg2: memref<3x128xf32, #tpu.memory_space<vmem>>, %arg3: memref<1x128xf32, #tpu.memory_space<vmem>>) attributes {dimension_semantics = [#tpu.dimension_semantics<parallel>], iteration_bounds = array<i64: 1>, scalar_prefetch = 0 : i64, scratch_operands = 0 : i64, tpu.core_type = #tpu.core_type<tc>, window_params = [{transform_indices = @transform_0, window_bounds = array<i64: 11>}, {transform_indices = @transform_1, window_bounds = array<i64: 3, 128>}, {transform_indices = @transform_2, window_bounds = array<i64: 1, 128>}]} {
    %c0 = arith.constant 0 : index
    %c0_0 = arith.constant 0 : index
    %0 = vector.load %arg2[%c0, %c0_0] : memref<3x128xf32, #tpu.memory_space<vmem>>, vector<1x128xf32>
    %c1 = arith.constant 1 : index
    %c0_1 = arith.constant 0 : index
    %1 = vector.load %arg2[%c1, %c0_1] : memref<3x128xf32, #tpu.memory_space<vmem>>, vector<1x128xf32>
    %c2 = arith.constant 2 : index
    %c0_2 = arith.constant 0 : index
    %2 = vector.load %arg2[%c2, %c0_2] : memref<3x128xf32, #tpu.memory_space<vmem>>, vector<1x128xf32>
    %c0_3 = arith.constant 0 : index
    %3 = memref.load %arg1[%c0_3] : memref<11xf32, #tpu.memory_space<smem>>
    %4 = vector.broadcast %3 : f32 to vector<1x128xf32>
    %5 = arith.mulf %0, %4 : vector<1x128xf32>
    %c1_4 = arith.constant 1 : index
    %6 = memref.load %arg1[%c1_4] : memref<11xf32, #tpu.memory_space<smem>>
    %7 = vector.broadcast %6 : f32 to vector<1x128xf32>
    %8 = arith.mulf %1, %7 : vector<1x128xf32>
    %9 = arith.addf %5, %8 : vector<1x128xf32>
    %c2_5 = arith.constant 2 : index
    %10 = memref.load %arg1[%c2_5] : memref<11xf32, #tpu.memory_space<smem>>
    %11 = vector.broadcast %10 : f32 to vector<1x128xf32>
    %12 = arith.mulf %2, %11 : vector<1x128xf32>
    %13 = arith.addf %9, %12 : vector<1x128xf32>
    %c6 = arith.constant 6 : index
    %14 = memref.load %arg1[%c6] : memref<11xf32, #tpu.memory_space<smem>>
    %15 = vector.broadcast %14 : f32 to vector<1x128xf32>
    %16 = arith.addf %13, %15 : vector<1x128xf32>
    %c3 = arith.constant 3 : index
    %17 = memref.load %arg1[%c3] : memref<11xf32, #tpu.memory_space<smem>>
    %18 = vector.broadcast %17 : f32 to vector<1x128xf32>
    %19 = arith.mulf %0, %18 : vector<1x128xf32>
    %c4 = arith.constant 4 : index
    %20 = memref.load %arg1[%c4] : memref<11xf32, #tpu.memory_space<smem>>
    %21 = vector.broadcast %20 : f32 to vector<1x128xf32>
    %22 = arith.mulf %1, %21 : vector<1x128xf32>
    %23 = arith.addf %19, %22 : vector<1x128xf32>
    %c5 = arith.constant 5 : index
    %24 = memref.load %arg1[%c5] : memref<11xf32, #tpu.memory_space<smem>>
    %25 = vector.broadcast %24 : f32 to vector<1x128xf32>
    %26 = arith.mulf %2, %25 : vector<1x128xf32>
    %27 = arith.addf %23, %26 : vector<1x128xf32>
    %c7 = arith.constant 7 : index
    %28 = memref.load %arg1[%c7] : memref<11xf32, #tpu.memory_space<smem>>
    %29 = vector.broadcast %28 : f32 to vector<1x128xf32>
    %30 = arith.addf %27, %29 : vector<1x128xf32>
    %cst = arith.constant 0.000000e+00 : f32
    %31 = vector.broadcast %cst : f32 to vector<1x128xf32>
    %32 = arith.maximumf %16, %31 : vector<1x128xf32>
    %cst_6 = arith.constant 0.000000e+00 : f32
    %33 = vector.broadcast %cst_6 : f32 to vector<1x128xf32>
    %34 = arith.maximumf %30, %33 : vector<1x128xf32>
    %c8 = arith.constant 8 : index
    %35 = memref.load %arg1[%c8] : memref<11xf32, #tpu.memory_space<smem>>
    %36 = vector.broadcast %35 : f32 to vector<1x128xf32>
    %37 = arith.mulf %32, %36 : vector<1x128xf32>
    %c9 = arith.constant 9 : index
    %38 = memref.load %arg1[%c9] : memref<11xf32, #tpu.memory_space<smem>>
    %39 = vector.broadcast %38 : f32 to vector<1x128xf32>
    %40 = arith.mulf %34, %39 : vector<1x128xf32>
    %41 = arith.addf %37, %40 : vector<1x128xf32>
    %c10 = arith.constant 10 : index
    %42 = memref.load %arg1[%c10] : memref<11xf32, #tpu.memory_space<smem>>
    %43 = vector.broadcast %42 : f32 to vector<1x128xf32>
    %44 = arith.addf %41, %43 : vector<1x128xf32>
    %c0_7 = arith.constant 0 : index
    %c0_8 = arith.constant 0 : index
    %45 = vector.load %arg3[%c0_7, %c0_8] : memref<1x128xf32, #tpu.memory_space<vmem>>, vector<1x128xf32>
    tpu.vector_store %arg3[%c0_7, %c0_8], %44 {strides = array<i32>} : memref<1x128xf32, #tpu.memory_space<vmem>>, vector<1x128xf32>,
    return
  }
  func.func @transform_0(%arg0: i32) -> i32 {
    %c0_i32 = arith.constant 0 : i32
    %c0_i32_0 = arith.constant 0 : i32
    return %c0_i32 : i32
  }
  func.func @transform_1(%arg0: i32) -> (i32, i32) {
    %c0_i32 = arith.constant 0 : i32
    %c0_i32_0 = arith.constant 0 : i32
    return %c0_i32, %arg0 : i32, i32
  }
  func.func @transform_2(%arg0: i32) -> (i32, i32) {
    %c0_i32 = arith.constant 0 : i32
    %c0_i32_0 = arith.constant 0 : i32
    return %c0_i32, %arg0 : i32, i32
  }
}

</mosaic_0001>

<llo_original>
// kernel: mlp_forward.1
$region0: #{mlp_forward.1}
  #allocation0 [shape = 'u32[]', space=smem, size = 0x4, offset = 0x4, fixed_abs, tag = 'smem constant byte address 0x4 - core index']
  #allocation1 [shape = 'u32[72,128]{1,0:T(1,128)}', space=vmem, size = 0x9000, scoped, tag = 'internal scratch']
  %s0 = inlined_call_operand.vmem [shape: f32[11], index: 0, kind: input, shape index: {}]
  %s1 = inlined_call_operand.vmem [shape: f32[3,128], index: 1, kind: input, shape index: {}]
  %s2 = inlined_call_operand.vmem [shape: f32[1,128], index: 2, kind: output, shape index: {}]
  %s3 = sld [smem:[#allocation0]]
  $region22: #{mlp_forward.1} parent=0
    _
  %s5 = ssub.s32 1, %s3
  %s6 = scalar_select 0, %s5, %s3
  $region1: #{mlp_forward.1} parent=0
    #allocation2 [shape = 'u8[512]{0}', space=smem, size = 0x200, scoped, tag = 'input window, operand 0, single buffered']
    #allocation3 [shape = 's32[1]{0}', space=sflag, size = 0x4, scoped, tag = 'scoped memory for mlp_forward.1']
    %7 = vsyncpa [#allocation3], 0
    // Predicated region
    $region2: #{mlp_forward.1} parent=1 // pred_check
      _
    $region3: #{mlp_forward.1} parent=1 // pred_check_branch
      %9 = sbr.rel (0) target = $region5
    $region4: #{mlp_forward.1} parent=1 // pred_region
      %11 = vsyncadd [#allocation3], 0
      %s13 = sshll.u32 %s0, 4
      %s14 = int_to_ptr.vmem [resolvable:$true] %s13
      %16 = dma.vmem_to_smem %s14, 16, [#allocation2], [#allocation3]
    $region5: #{mlp_forward.1} parent=1 // pred_fallthru
      _
    // Predicated region
    $region6: #{mlp_forward.1} parent=1 // pred_check
      _
    $region7: #{mlp_forward.1} parent=1 // pred_check_branch
      %18 = sbr.rel (0) target = $region9
    $region8: #{mlp_forward.1} parent=1 // pred_region
      _
    $region9: #{mlp_forward.1} parent=1 // pred_fallthru
      _
    // Predicated region
    $region10: #{mlp_forward.1} parent=1 // pred_check
      _
    $region11: #{mlp_forward.1} parent=1 // pred_check_branch
      %20 = sbr.rel (0) target = $region13
    $region12: #{mlp_forward.1} parent=1 // pred_region
      %22 = dma.done [#allocation3], 16
    $region13: #{mlp_forward.1} parent=1 // pred_fallthru
      _
    %23 = sfence
    %v24 = vld [vmem:[%s1] sm:$0x1]
    %v25 = vld [vmem:[%s1 + $0x1] sm:$0x1]
    %v26 = vld [vmem:[%s1 + $0x2] sm:$0x1]
    %s27 = sld [smem:[#allocation2]]
    %v28 = vstv %s27
    %v29 = vmul.f32 %v24, %v28
    %s30 = sld [smem:[#allocation2 + $0x1]]
    %v31 = vstv %s30
    %v32 = vmul.f32 %v25, %v31
    %v33 = vadd.f32 %v29, %v32
    %s34 = sld [smem:[#allocation2 + $0x2]]
    %v35 = vstv %s34
    %v36 = vmul.f32 %v26, %v35
    %v37 = vadd.f32 %v33, %v36
    %s38 = sld [smem:[#allocation2 + $0x6]]
    %v39 = vstv %s38
    %v40 = vadd.f32 %v37, %v39
    %s41 = sld [smem:[#allocation2 + $0x3]]
    %v42 = vstv %s41
    %v43 = vmul.f32 %v24, %v42
    %s44 = sld [smem:[#allocation2 + $0x4]]
    %v45 = vstv %s44
    %v46 = vmul.f32 %v25, %v45
    %v47 = vadd.f32 %v43, %v46
    %s48 = sld [smem:[#allocation2 + $0x5]]
    %v49 = vstv %s48
    %v50 = vmul.f32 %v26, %v49
    %v51 = vadd.f32 %v47, %v50
    %s52 = sld [smem:[#allocation2 + $0x7]]
    %v53 = vstv %s52
    %v54 = vadd.f32 %v51, %v53
    %v55 = vmax.f32 %v40, 0.0
    %v56 = vmax.f32 %v54, 0.0
    %s57 = sld [smem:[#allocation2 + $0x8]]
    %v58 = vstv %s57
    %v59 = vmul.f32 %v55, %v58
    %s60 = sld [smem:[#allocation2 + $0x9]]
    %v61 = vstv %s60
    %v62 = vmul.f32 %v56, %v61
    %v63 = vadd.f32 %v59, %v62
    %s64 = sld [smem:[#allocation2 + $0xa]]
    %v65 = vstv %s64
    %v66 = vadd.f32 %v63, %v65
    %67 = vst [vmem:[%s2] sm:$0x1] %v66
    // Predicated region
    $region14: #{mlp_forward.1} parent=1 // pred_check
      _
    $region15: #{mlp_forward.1} parent=1 // pred_check_branch
      %69 = sbr.rel (0) target = $region17
    $region16: #{mlp_forward.1} parent=1 // pred_region
      _
    $region17: #{mlp_forward.1} parent=1 // pred_fallthru
      _
    // Predicated region
    $region18: #{mlp_forward.1} parent=1 // pred_check
      _
    $region19: #{mlp_forward.1} parent=1 // pred_check_branch
      %71 = sbr.rel (0) target = $region21
    $region20: #{mlp_forward.1} parent=1 // pred_region
      _
    $region21: #{mlp_forward.1} parent=1 // pred_fallthru
      _
    %72 = vsyncpa [#allocation3], 1

</llo_original>
